<compile_context>
chip_gen: v7x
topology: tpu7x:2x2x1
jax: 0.10.0
libtpu: 0.0.40
codegen_flags: <defaults>
</compile_context>

<pallas_src>
import functools

import jax
import jax.numpy as jnp
from jax.experimental import pallas as pl
from jax.experimental.pallas import tpu as pltpu

_NN = (((1,), (0,)), ((), ()))  # plain matmul
_NT = (((1,), (1,)), ((), ()))  # matmul with rhs transposed


def _pick_tile(n, preferred):
    """Whole axis if small, else the largest 128-multiple <= preferred dividing n."""
    if n <= preferred:
        return n
    t = (preferred // 128) * 128
    while t >= 128:
        if n % t == 0:
            return t
        t -= 128
    return n


def qkv_proj_kernel(x_ref, w_ref, q_ref, k_ref, v_ref, *, hidden):
    # x_ref: (1, TM, C) bf16 input rows; w_ref: (C, 3*hidden) bf16 (Wq scaled).
    # Each input row is projected exactly once for the whole attention.
    x = x_ref[0]                                                   # (TM, C)
    proj = jax.lax.dot_general(x, w_ref[...], _NN,
                               preferred_element_type=jnp.float32)  # (TM, 3*hidden)
    proj = proj.astype(jnp.bfloat16)
    q_ref[0] = proj[:, :hidden]
    k_ref[0] = proj[:, hidden:2 * hidden]
    v_ref[0] = proj[:, 2 * hidden:]


def flash_attn_kernel(q_ref, k_ref, v_ref, wout_ref, bout_ref, o_ref,
                      acc_ref, m_ref, l_ref, *, heads, dim_head):
    # q_ref:    (1, TQ, hidden) bf16   pre-projected, pre-scaled queries
    # k_ref:    (1, TK, hidden) bf16   pre-projected keys
    # v_ref:    (1, TK, hidden) bf16   pre-projected values
    # wout_ref: (C, hidden)     bf16   output projection
    # bout_ref: (C, 1)          f32    output bias
    # o_ref:    (1, C, TQ)      f32    lane-dense output block
    # acc_ref:  (TQ, hidden)    f32    online-softmax numerator accumulator
    # m_ref:    (TQ, heads)     f32    running row max (per head)
    # l_ref:    (TQ, heads)     f32    running row sum (per head)
    d = dim_head
    kv_i = pl.program_id(2)
    n_kv = pl.num_programs(2)

    @pl.when(kv_i == 0)
    def _init():
        acc_ref[...] = jnp.zeros(acc_ref.shape, jnp.float32)
        m_ref[...] = jnp.full(m_ref.shape, -jnp.inf, jnp.float32)
        l_ref[...] = jnp.zeros(l_ref.shape, jnp.float32)

    q = q_ref[0]   # (TQ, hidden)
    k = k_ref[0]   # (TK, hidden)
    v = v_ref[0]   # (TK, hidden)

    # Read running state once; write it back once (single full-width stores).
    m_prev = m_ref[...]
    l_prev = l_ref[...]
    acc_prev = acc_ref[...]

    m_cols, l_cols, acc_cols = [], [], []
    for h in range(heads):                      # heads is small; static unroll
        sl = slice(h * d, (h + 1) * d)
        # sim[i, j] = sum_d q[i, d] * k[j, d]   (scale already folded into W_q)
        sim = jax.lax.dot_general(q[:, sl], k[:, sl], _NT,
                                  preferred_element_type=jnp.float32)  # (TQ, TK)
        m_p = m_prev[:, h:h + 1]                                        # (TQ, 1)
        m_new = jnp.maximum(m_p, jnp.max(sim, axis=-1, keepdims=True))
        alpha = jnp.exp(m_p - m_new)                                    # (TQ, 1)
        p = jnp.exp(sim - m_new)                                        # (TQ, TK) f32

        l_cols.append(alpha * l_prev[:, h:h + 1]
                      + jnp.sum(p, axis=-1, keepdims=True))
        m_cols.append(m_new)

        pv = jax.lax.dot_general(p.astype(jnp.bfloat16), v[:, sl], _NN,
                                 preferred_element_type=jnp.float32)    # (TQ, d)
        acc_cols.append(alpha * acc_prev[:, sl] + pv)

    m_ref[...] = jnp.concatenate(m_cols, axis=1)
    l_ref[...] = jnp.concatenate(l_cols, axis=1)
    acc_ref[...] = jnp.concatenate(acc_cols, axis=1)

    @pl.when(kv_i == n_kv - 1)
    def _finalize():
        # Normalize per head (VPU), then ONE fused K=hidden output projection.
        inv_l = pl.reciprocal(l_ref[...], approx=True)                  # (TQ, heads)
        acc = acc_ref[...]
        norm_cols = [acc[:, h * d:(h + 1) * d] * inv_l[:, h:h + 1]
                     for h in range(heads)]
        acc_norm = jnp.concatenate(norm_cols, axis=1).astype(jnp.bfloat16)  # (TQ, hid)
        final = jax.lax.dot_general(wout_ref[...], acc_norm, _NT,
                                    preferred_element_type=jnp.float32)     # (C, TQ)
        o_ref[0] = (final + bout_ref[...]).astype(o_ref.dtype)


def attention_forward(x_nchw, w_qkv, w_out, b_out, *, heads, dim_head,
                      q_tile=256, kv_tile=512, proj_tile=512):
    B, C, H, W = x_nchw.shape
    N = H * W
    hidden = heads * dim_head
    scale = dim_head ** (-0.5)

    tq = _pick_tile(N, q_tile)
    tk = _pick_tile(N, kv_tile)
    tm = _pick_tile(N, proj_tile)

    # NCHW -> (B, N, C) once (single XLA transpose) for the projection GEMM.
    x_nc = x_nchw.reshape(B, C, N).transpose(0, 2, 1).astype(jnp.bfloat16)

    # Lane-dense (C, 3*hidden) packed QKV weight; softmax scale folded into W_q.
    w_qkv2 = w_qkv.reshape(3 * hidden, C).astype(jnp.float32)
    w_pack = jnp.concatenate([w_qkv2[:hidden] * scale, w_qkv2[hidden:]],
                             axis=0).T.astype(jnp.bfloat16)           # (C, 3*hidden)
    w_o = w_out.reshape(C, hidden).astype(jnp.bfloat16)               # (C, hidden)
    b_o = b_out.reshape(C, 1).astype(jnp.float32)                     # (C, 1)

    # ---- Stage 1: QKV 1x1-conv projection (each row projected exactly once).
    proj_kernel = functools.partial(qkv_proj_kernel, hidden=hidden)
    q, k, v = pl.pallas_call(
        proj_kernel,
        out_shape=(jax.ShapeDtypeStruct((B, N, hidden), jnp.bfloat16),) * 3,
        grid_spec=pltpu.PrefetchScalarGridSpec(
            num_scalar_prefetch=0,
            grid=(B, N // tm),
            in_specs=[
                pl.BlockSpec((1, tm, C), lambda b, i: (b, i, 0)),
                pl.BlockSpec((C, 3 * hidden), lambda b, i: (0, 0)),
            ],
            out_specs=(
                pl.BlockSpec((1, tm, hidden), lambda b, i: (b, i, 0)),
                pl.BlockSpec((1, tm, hidden), lambda b, i: (b, i, 0)),
                pl.BlockSpec((1, tm, hidden), lambda b, i: (b, i, 0)),
            ),
        ),
        compiler_params=pltpu.CompilerParams(
            dimension_semantics=("parallel", "parallel")),
    )(x_nc, w_pack)

    # ---- Stage 2: flash attention + fused output projection.
    # VMEM budget (per grid step, double-buffered blocks): q/k/v bf16 blocks
    # + (tq, hidden) f32 acc + (tq, tk) f32 softmax temporaries ≈ a few MiB at
    # the default tiles — comfortably under the 32 MiB scoped limit and far
    # below v7x's 64 MiB physical VMEM.
    kernel = functools.partial(flash_attn_kernel, heads=heads, dim_head=dim_head)
    out = pl.pallas_call(
        kernel,
        out_shape=jax.ShapeDtypeStruct((B, C, N), jnp.float32),
        grid_spec=pltpu.PrefetchScalarGridSpec(
            num_scalar_prefetch=0,
            grid=(B, N // tq, N // tk),
            in_specs=[
                pl.BlockSpec((1, tq, hidden), lambda b, qi, ki: (b, qi, 0)),  # Q
                pl.BlockSpec((1, tk, hidden), lambda b, qi, ki: (b, ki, 0)),  # K
                pl.BlockSpec((1, tk, hidden), lambda b, qi, ki: (b, ki, 0)),  # V
                pl.BlockSpec((C, hidden), lambda b, qi, ki: (0, 0)),          # W_out
                pl.BlockSpec((C, 1), lambda b, qi, ki: (0, 0)),               # b_out
            ],
            out_specs=pl.BlockSpec((1, C, tq), lambda b, qi, ki: (b, 0, qi)),
            scratch_shapes=[
                pltpu.VMEM((tq, hidden), jnp.float32),   # acc
                pltpu.VMEM((tq, heads), jnp.float32),    # running max m
                pltpu.VMEM((tq, heads), jnp.float32),    # running sum l
            ],
        ),
        compiler_params=pltpu.CompilerParams(
            dimension_semantics=("parallel", "parallel", "arbitrary"),
            vmem_limit_bytes=32 * 1024 * 1024,
        ),
    )(q, k, v, w_o, b_o)

    # (B, C, N) -> NCHW: pure reshape, no transpose (lane-dense output layout).
    return out.reshape(B, C, H, W)


def attention_reference(x, w_qkv, w_out, b_out, *, heads, dim_head):
    """Pure-JAX f32 replica of the PyTorch forward (for correctness check)."""
    B, C, H, W = x.shape
    N = H * W
    hidden = heads * dim_head
    scale = dim_head ** (-0.5)

    xf = x.reshape(B, C, N)                                      # (B, C, N)
    qkv = jnp.einsum('oc,bcn->bon', w_qkv, xf)                   # (B, 3*hidden, N)
    q, k, v = jnp.split(qkv, 3, axis=1)
    resh = lambda t: t.reshape(B, heads, dim_head, N)            # 'b (h c) n -> b h c n'
    q, k, v = map(resh, (q, k, v))
    q = q * scale
    sim = jnp.einsum('bhdi,bhdj->bhij', q, k)
    attn = jax.nn.softmax(sim, axis=-1)
    out = jnp.einsum('bhij,bhdj->bhid', attn, v)                 # (B, h, N, d)
    out = out.transpose(0, 1, 3, 2).reshape(B, hidden, H, W)     # 'b h (x y) d -> b (h d) x y'
    final = jnp.einsum('oc,bchw->bohw', w_out, out) + b_out.reshape(1, -1, 1, 1)
    return final


if __name__ == "__main__":
    # Module config (nn.Module defaults: heads=4, dim_head=32)
    dim = 4
    heads = 4
    dim_head = 32
    hidden = heads * dim_head

    # x is NCHW = (2, 4, 16, 16) -> N = 256 -> flash grid collapses to (2, 1, 1)
    # (B=2 keeps >= 2 parallel grid units for v7x's two TensorCores).
    B, H, W = 2, 16, 16

    key = jax.random.PRNGKey(0)
    kx, kq, kw, kb = jax.random.split(key, 4)

    x = jax.random.normal(kx, (B, dim, H, W), dtype=jnp.float32)
    # to_qkv: Conv2d(dim, hidden*3, 1, bias=False) -> weight (3*hidden, dim)
    w_qkv = jax.random.normal(kq, (3 * hidden, dim), dtype=jnp.float32) * 0.1
    # to_out: Conv2d(hidden, dim, 1) -> weight (dim, hidden) + bias (dim,)
    w_out = jax.random.normal(kw, (dim, hidden), dtype=jnp.float32) * 0.1
    b_out = jax.random.normal(kb, (dim,), dtype=jnp.float32) * 0.1

    y = attention_forward(x, w_qkv, w_out, b_out, heads=heads, dim_head=dim_head)
    y = jax.block_until_ready(y)

    y_ref = attention_reference(x, w_qkv, w_out, b_out, heads=heads, dim_head=dim_head)
    assert y.shape == (B, dim, H, W), y.shape
    # bf16 MXU operands (f32 accumulation) -> loosened tolerance vs f32 reference.
    assert jnp.allclose(y, y_ref, atol=3e-2, rtol=3e-2), float(jnp.max(jnp.abs(y - y_ref)))

    print("KERNEL_OK")
</pallas_src>

<mosaic_0001>
module attributes {stable_mosaic.version = 11 : i64} {
  func.func @qkv_proj_kernel(%arg0: i32, %arg1: i32, %arg2: memref<1x256x4xbf16, #tpu.memory_space<vmem>>, %arg3: memref<4x384xbf16, #tpu.memory_space<vmem>>, %arg4: memref<1x256x128xbf16, #tpu.memory_space<vmem>>, %arg5: memref<1x256x128xbf16, #tpu.memory_space<vmem>>, %arg6: memref<1x256x128xbf16, #tpu.memory_space<vmem>>) attributes {dimension_semantics = [#tpu.dimension_semantics<parallel>, #tpu.dimension_semantics<parallel>], iteration_bounds = array<i64: 2, 1>, scalar_prefetch = 0 : i64, scratch_operands = 0 : i64, tpu.core_type = #tpu.core_type<tc>, window_params = [{transform_indices = @transform_0, window_bounds = array<i64: 1, 256, 4>}, {pipeline_mode = #tpu.pipeline_mode<synchronous>, transform_indices = @transform_1, window_bounds = array<i64: 4, 384>}, {transform_indices = @transform_2, window_bounds = array<i64: 1, 256, 128>}, {transform_indices = @transform_3, window_bounds = array<i64: 1, 256, 128>}, {transform_indices = @transform_4, window_bounds = array<i64: 1, 256, 128>}]} {
    %c0 = arith.constant 0 : index
    %c0_0 = arith.constant 0 : index
    %c0_1 = arith.constant 0 : index
    %0 = vector.load %arg2[%c0, %c0_0, %c0_1] : memref<1x256x4xbf16, #tpu.memory_space<vmem>>, vector<1x256x4xbf16>
    %1 = vector.shape_cast %0 : vector<1x256x4xbf16> to vector<256x4xbf16>
    %c0_2 = arith.constant 0 : index
    %c0_3 = arith.constant 0 : index
    %2 = vector.load %arg3[%c0_2, %c0_3] : memref<4x384xbf16, #tpu.memory_space<vmem>>, vector<4x384xbf16>
    %cst = arith.constant dense<0.000000e+00> : vector<256x384xf32>
    %3 = tpu.matmul %1, %2, %cst {dimension_numbers = #tpu.dot_dimension_numbers<[1], [0], [0], [1], [0, 0, 1, 1], [], []>} : vector<256x4xbf16>, vector<4x384xbf16>, vector<256x384xf32> -> vector<256x384xf32>
    %4 = arith.truncf %3 : vector<256x384xf32> to vector<256x384xbf16>
    %5 = vector.extract_strided_slice %4 {offsets = [0, 0], sizes = [256, 128], strides = [1, 1]} : vector<256x384xbf16> to vector<256x128xbf16>
    %c0_4 = arith.constant 0 : index
    %c0_5 = arith.constant 0 : index
    %c0_6 = arith.constant 0 : index
    %6 = vector.load %arg4[%c0_4, %c0_5, %c0_6] : memref<1x256x128xbf16, #tpu.memory_space<vmem>>, vector<1x256x128xbf16>
    %7 = vector.shape_cast %6 : vector<1x256x128xbf16> to vector<256x128xbf16>
    %8 = vector.shape_cast %5 : vector<256x128xbf16> to vector<1x256x128xbf16>
    tpu.vector_store %arg4[%c0_4, %c0_5, %c0_6], %8 {strides = array<i32>} : memref<1x256x128xbf16, #tpu.memory_space<vmem>>, vector<1x256x128xbf16>,
    %9 = vector.extract_strided_slice %4 {offsets = [0, 128], sizes = [256, 128], strides = [1, 1]} : vector<256x384xbf16> to vector<256x128xbf16>
    %c0_7 = arith.constant 0 : index
    %c0_8 = arith.constant 0 : index
    %c0_9 = arith.constant 0 : index
    %10 = vector.load %arg5[%c0_7, %c0_8, %c0_9] : memref<1x256x128xbf16, #tpu.memory_space<vmem>>, vector<1x256x128xbf16>
    %11 = vector.shape_cast %10 : vector<1x256x128xbf16> to vector<256x128xbf16>
    %12 = vector.shape_cast %9 : vector<256x128xbf16> to vector<1x256x128xbf16>
    tpu.vector_store %arg5[%c0_7, %c0_8, %c0_9], %12 {strides = array<i32>} : memref<1x256x128xbf16, #tpu.memory_space<vmem>>, vector<1x256x128xbf16>,
    %13 = vector.extract_strided_slice %4 {offsets = [0, 256], sizes = [256, 128], strides = [1, 1]} : vector<256x384xbf16> to vector<256x128xbf16>
    %c0_10 = arith.constant 0 : index
    %c0_11 = arith.constant 0 : index
    %c0_12 = arith.constant 0 : index
    %14 = vector.load %arg6[%c0_10, %c0_11, %c0_12] : memref<1x256x128xbf16, #tpu.memory_space<vmem>>, vector<1x256x128xbf16>
    %15 = vector.shape_cast %14 : vector<1x256x128xbf16> to vector<256x128xbf16>
    %16 = vector.shape_cast %13 : vector<256x128xbf16> to vector<1x256x128xbf16>
    tpu.vector_store %arg6[%c0_10, %c0_11, %c0_12], %16 {strides = array<i32>} : memref<1x256x128xbf16, #tpu.memory_space<vmem>>, vector<1x256x128xbf16>,
    return
  }
  func.func @transform_0(%arg0: i32, %arg1: i32) -> (i32, i32, i32) {
    %c0_i32 = arith.constant 0 : i32
    %c0_i32_0 = arith.constant 0 : i32
    return %arg0, %arg1, %c0_i32 : i32, i32, i32
  }
  func.func @transform_1(%arg0: i32, %arg1: i32) -> (i32, i32) {
    %c0_i32 = arith.constant 0 : i32
    %c0_i32_0 = arith.constant 0 : i32
    %c0_i32_1 = arith.constant 0 : i32
    return %c0_i32, %c0_i32_0 : i32, i32
  }
  func.func @transform_2(%arg0: i32, %arg1: i32) -> (i32, i32, i32) {
    %c0_i32 = arith.constant 0 : i32
    %c0_i32_0 = arith.constant 0 : i32
    return %arg0, %arg1, %c0_i32 : i32, i32, i32
  }
  func.func @transform_3(%arg0: i32, %arg1: i32) -> (i32, i32, i32) {
    %c0_i32 = arith.constant 0 : i32
    %c0_i32_0 = arith.constant 0 : i32
    return %arg0, %arg1, %c0_i32 : i32, i32, i32
  }
  func.func @transform_4(%arg0: i32, %arg1: i32) -> (i32, i32, i32) {
    %c0_i32 = arith.constant 0 : i32
    %c0_i32_0 = arith.constant 0 : i32
    return %arg0, %arg1, %c0_i32 : i32, i32, i32
  }
}

</mosaic_0001>

<llo_original>
// kernel: tpu_custom_call.1
$region0: #{tpu_custom_call.1}
  #allocation0 [shape = 'u32[]', space=smem, size = 0x4, offset = 0x4, fixed_abs, tag = 'smem constant byte address 0x4 - core index']
  #allocation1 [shape = 'u32[144,128]{1,0:T(1,128)}', space=vmem, size = 0x12000, scoped, tag = 'internal scratch']
  %s0 = inlined_call_operand.vmem [shape: bf16[2,256,4], index: 0, kind: input, shape index: {}]
  %s1 = inlined_call_operand.vmem [shape: bf16[4,384], index: 1, kind: input, shape index: {}]
  %s2 = inlined_call_operand.hbm [shape: bf16[2,256,128], index: 2, kind: output, shape index: {0}]
  %s3 = inlined_call_operand.hbm [shape: bf16[2,256,128], index: 3, kind: output, shape index: {1}]
  %s4 = inlined_call_operand.hbm [shape: bf16[2,256,128], index: 4, kind: output, shape index: {2}]
  %5 = xla_tuple %s2, %s3, %s4
  %s6 = sld [smem:[#allocation0]]
  $region57: #{tpu_custom_call.1} parent=0
    _
  %s8 = ssub.s32 1, %s6
  %s9 = scalar_select 0, %s8, %s6
  $region1: #{tpu_custom_call.1} parent=0
    #allocation2 [shape = 'u8[131072]{0}', space=vmem, size = 0x20000, scoped, tag = 'output window, operand 0']
    #allocation3 [shape = 's32[2]{0}', space=sflag, size = 0x8, scoped, tag = 'scoped memory for tpu_custom_call.1']
    #allocation4 [shape = 'u8[131072]{0}', space=vmem, size = 0x20000, scoped, tag = 'output window, operand 1']
    #allocation5 [shape = 's32[2]{0}', space=sflag, size = 0x8, scoped, tag = 'scoped memory for tpu_custom_call.1']
    #allocation6 [shape = 'u8[131072]{0}', space=vmem, size = 0x20000, scoped, tag = 'output window, operand 2']
    %10 = vsyncpa [#allocation3], 0
    %s11 = scalar_lea.sflag [#allocation3], 1
    %12 = vsyncpa %s11, 0
    %13 = vsyncpa [#allocation5], 0
    %s14 = scalar_lea.sflag [#allocation5], 1
    %15 = vsyncpa %s14, 0
    loop: start=0, step=1, limit=4
    $region2: #{tpu_custom_call.1} parent=1 // loop_pre_header
      _
    $region3: #{tpu_custom_call.1} parent=1 // loop_header
      %s17 = sphi 0, %s21
      %p18 = scmp.ge.s32.totalorder %s17, 4
      %s24 = sphi 0, %s36
      %s25 = sphi 0, %s32
      %s26 = sphi 0, %s24
      %s27 = sphi 0, %s25
      %s28 = sphi 0, %s26
      %s29 = sphi 0, %s27
      %s41 = sphi 0, %s43
      %s44 = sphi 0, %s41
      %s45 = sphi 0, %s44
      %s61 = sphi 0, %s45
      %s65 = sphi 0, %s65
      %s67 = sphi 0, %s65
      %s68 = sphi 0, %s67
      %s82 = sphi 0, %s68
      %s90 = sphi 0, %s92
      %s93 = sphi 0, %s90
      %s94 = sphi 0, %s93
      %s110 = sphi 0, %s94
      %s118 = sphi 0, %s120
      %s121 = sphi 0, %s118
      %s122 = sphi 0, %s121
      %s138 = sphi 0, %s122
      %s146 = sphi 0, %s148
      %s149 = sphi 0, %s146
      %s150 = sphi 0, %s149
      %s166 = sphi 0, %s150
    $region4: #{tpu_custom_call.1} parent=1 // loop_header_branch
      %20 = sbr.rel (%p18) target = $region8
    $region5: #{tpu_custom_call.1} parent=1 // loop_body
      %s22 = ssub.s32 %s17, 1
      %s23 = ssub.s32 %s17, 2
      %s30 = sadd.s32 1, %s25
      %p31 = scmp.ge.s32.totalorder %s30, 1
      %s32 = scalar_select %p31, 0, %s30
      %s33 = sadd.s32 1, %s24
      %s34 = scalar_select %p31, %s33, %s24
      %p35 = scmp.ge.s32.totalorder %s34, 2
      %s36 = scalar_select %p35, 0, %s34
      %s37 = ssub.s32 %s24, %s36
      %s38 = ssub.s32 %s25, %s32
      %s39 = sor.u32 %s37, %s38
      %p40 = scmp.eq.s32.totalorder %s39, 0
      %s42 = sadd.s32 %s41, 1
      %s43 = scalar_select %p40, %s41, %s42
      %p46 = pneg %p40
      %p47 = scmp.eq.s32.totalorder %s17, 1
      %p48 = por %p46, %p47
      %p49 = scmp.ne.s32.totalorder %s41, %s44
      %p50 = scmp.eq.s32.totalorder %s17, 0
      %p51 = por %p49, %p50
      %p52 = scmp.ne.s32.totalorder %s41, %s44
      %p53 = scmp.eq.s32.totalorder %s22, 1
      %p54 = por %p52, %p53
      %p55 = scmp.ne.s32.totalorder %s44, %s45
      %p56 = scmp.eq.s32.totalorder %s22, 0
      %p57 = por %p55, %p56
      %p58 = scmp.ne.s32.totalorder %s44, %s45
      %p59 = scmp.eq.s32.totalorder %s23, 1
      %p60 = por %p58, %p59
      %p62 = scmp.ne.s32.totalorder %s45, %s61
      %p63 = scmp.eq.s32.totalorder %s23, 0
      %p64 = por %p62, %p63
      %s66 = sadd.s32 %s65, 1
      %p69 = scmp.eq.s32.totalorder %s17, 1
      %p70 = scmp.ne.s32.totalorder %s65, %s67
      %p71 = scmp.eq.s32.totalorder %s17, 0
      %p72 = por %p70, %p71
      %p73 = scmp.ne.s32.totalorder %s65, %s67
      %p74 = scmp.eq.s32.totalorder %s22, 1
      %p75 = por %p73, %p74
      %p76 = scmp.ne.s32.totalorder %s67, %s68
      %p77 = scmp.eq.s32.totalorder %s22, 0
      %p78 = por %p76, %p77
      %p79 = scmp.ne.s32.totalorder %s67, %s68
      %p80 = scmp.eq.s32.totalorder %s23, 1
      %p81 = por %p79, %p80
      %p83 = scmp.ne.s32.totalorder %s68, %s82
      %p84 = scmp.eq.s32.totalorder %s23, 0
      %p85 = por %p83, %p84
      %s86 = ssub.s32 %s24, %s36
      %s87 = ssub.s32 %s25, %s32
      %s88 = sor.u32 %s86, %s87
      %p89 = scmp.eq.s32.totalorder %s88, 0
      %s91 = sadd.s32 %s90, 1
      %s92 = scalar_select %p89, %s90, %s91
      %p95 = pneg %p89
      %p96 = scmp.eq.s32.totalorder %s17, 1
      %p97 = por %p95, %p96
      %p98 = scmp.ne.s32.totalorder %s90, %s93
      %p99 = scmp.eq.s32.totalorder %s17, 0
      %p100 = por %p98, %p99
      %p101 = scmp.ne.s32.totalorder %s90, %s93
      %p102 = scmp.eq.s32.totalorder %s22, 1
      %p103 = por %p101, %p102
      %p104 = scmp.ne.s32.totalorder %s93, %s94
      %p105 = scmp.eq.s32.totalorder %s22, 0
      %p106 = por %p104, %p105
      %p107 = scmp.ne.s32.totalorder %s93, %s94
      %p108 = scmp.eq.s32.totalorder %s23, 1
      %p109 = por %p107, %p108
      %p111 = scmp.ne.s32.totalorder %s94, %s110
      %p112 = scmp.eq.s32.totalorder %s23, 0
      %p113 = por %p111, %p112
      %s114 = ssub.s32 %s24, %s36
      %s115 = ssub.s32 %s25, %s32
      %s116 = sor.u32 %s114, %s115
      %p117 = scmp.eq.s32.totalorder %s116, 0
      %s119 = sadd.s32 %s118, 1
      %s120 = scalar_select %p117, %s118, %s119
      %p123 = pneg %p117
      %p124 = scmp.eq.s32.totalorder %s17, 1
      %p125 = por %p123, %p124
      %p126 = scmp.ne.s32.totalorder %s118, %s121
      %p127 = scmp.eq.s32.totalorder %s17, 0
      %p128 = por %p126, %p127
      %p129 = scmp.ne.s32.totalorder %s118, %s121
      %p130 = scmp.eq.s32.totalorder %s22, 1
      %p131 = por %p129, %p130
      %p132 = scmp.ne.s32.totalorder %s121, %s122
      %p133 = scmp.eq.s32.totalorder %s22, 0
      %p134 = por %p132, %p133
      %p135 = scmp.ne.s32.totalorder %s121, %s122
      %p136 = scmp.eq.s32.totalorder %s23, 1
      %p137 = por %p135, %p136
      %p139 = scmp.ne.s32.totalorder %s122, %s138
      %p140 = scmp.eq.s32.totalorder %s23, 0
      %p141 = por %p139, %p140
      %s142 = ssub.s32 %s24, %s36
      %s143 = ssub.s32 %s25, %s32
      %s144 = sor.u32 %s142, %s143
      %p145 = scmp.eq.s32.totalorder %s144, 0
      %s147 = sadd.s32 %s146, 1
      %s148 = scalar_select %p145, %s146, %s147
      %p151 = pneg %p145
      %p152 = scmp.eq.s32.totalorder %s17, 1
      %p153 = por %p151, %p152
      %p154 = scmp.ne.s32.totalorder %s146, %s149
      %p155 = scmp.eq.s32.totalorder %s17, 0
      %p156 = por %p154, %p155
      %p157 = scmp.ne.s32.totalorder %s146, %s149
      %p158 = scmp.eq.s32.totalorder %s22, 1
      %p159 = por %p157, %p158
      %p160 = scmp.ne.s32.totalorder %s149, %s150
      %p161 = scmp.eq.s32.totalorder %s22, 0
      %p162 = por %p160, %p161
      %p163 = scmp.ne.s32.totalorder %s149, %s150
      %p164 = scmp.eq.s32.totalorder %s23, 1
      %p165 = por %p163, %p164
      %p167 = scmp.ne.s32.totalorder %s150, %s166
      %p168 = scmp.eq.s32.totalorder %s23, 0
      %p169 = por %p167, %p168
      %p170 = scmp.le.s32.totalorder 1, %s17
      %p171 = scmp.lt.s32.totalorder %s17, 3
      %p172 = pnand %p170, %p171
      %p173 = pneg %p172
      // Predicated region
      $region9: #{tpu_custom_call.1} parent=5 // pred_check
        _
      $region10: #{tpu_custom_call.1} parent=5 // pred_check_branch
        %175 = sbr.rel (%p172) target = $region12
      $region11: #{tpu_custom_call.1} parent=5 // pred_region
        %s176 = ssub.s32 %s17, 1
        // Predicated region
        $region13: #{tpu_custom_call.1} parent=11 // pred_check
          %p177 = pneg %p78
        $region14: #{tpu_custom_call.1} parent=11 // pred_check_branch
          %179 = sbr.rel (%p177) target = $region16
        $region15: #{tpu_custom_call.1} parent=11 // pred_region
          _
        $region16: #{tpu_custom_call.1} parent=11 // pred_fallthru
          _
      $region12: #{tpu_custom_call.1} parent=5 // pred_fallthru
        _
      %p180 = scmp.lt.s32.totalorder %s17, 2
      // Predicated region
      $region17: #{tpu_custom_call.1} parent=5 // pred_check
        %p181 = pneg %p180
      $region18: #{tpu_custom_call.1} parent=5 // pred_check_branch
        %183 = sbr.rel (%p181) target = $region20
      $region19: #{tpu_custom_call.1} parent=5 // pred_region
        // Predicated region
        $region21: #{tpu_custom_call.1} parent=19 // pred_check
          %p184 = pneg %p51
        $region22: #{tpu_custom_call.1} parent=19 // pred_check_branch
          %186 = sbr.rel (%p184) target = $region24
        $region23: #{tpu_custom_call.1} parent=19 // pred_region
          %s187 = smul.u32 32, %s25
          %p188 = scmp.lt.s32.totalorder %s24, 1
          %s189 = scalar_select %p188, %s24, 1
          %p190 = scmp.lt.s32.totalorder %s187, 31
          %s191 = scalar_select %p190, %s187, 31
          %s192 = smul.addr %s189, 32
          %s193 = sadd.s32 %s191, %s192
          %s194 = smul.addr %s193, 4
          %s195 = scalar_lea.vmem %s0, %s194
          %s196 = smul.u32 32, %s25
        $region24: #{tpu_custom_call.1} parent=19 // pred_fallthru
          _
      $region20: #{tpu_custom_call.1} parent=5 // pred_fallthru
        _
      %p197 = scmp.le.s32.totalorder 1, %s17
      %p198 = scmp.lt.s32.totalorder %s17, 3
      %p199 = pnand %p197, %p198
      %p200 = pneg %p199
      // Predicated region
      $region25: #{tpu_custom_call.1} parent=5 // pred_check
        _
      $region26: #{tpu_custom_call.1} parent=5 // pred_check_branch
        %202 = sbr.rel (%p199) target = $region28
      $region27: #{tpu_custom_call.1} parent=5 // pred_region
        %s203 = ssub.s32 %s17, 1
        %s204 = smul.u32 32, %s27
        %p205 = scmp.lt.s32.totalorder %s26, 1
        %s206 = scalar_select %p205, %s26, 1
        %p207 = scmp.lt.s32.totalorder %s204, 31
        %s208 = scalar_select %p207, %s204, 31
        %s209 = smul.addr %s206, 32
        %s210 = sadd.s32 %s208, %s209
        %s211 = smul.addr %s210, 4
        %s212 = scalar_lea.vmem %s0, %s211
        %p213 = pneg %p57
        %p214 = pneg %p54
        %p215 = pneg %p78
        %p216 = pneg %p75
        %p217 = pneg %p106
        %p218 = pneg %p103
        %s219 = sand.u32 %s93, 1
        %s220 = scalar_lea.sflag [#allocation3], %s219
        %s221 = sand.u32 %s93, 1
        %s222 = smul.addr %s221, 128
        %s223 = scalar_lea.vmem [#allocation2], %s222
        %p224 = pneg %p134
        %p225 = pneg %p131
        %s226 = sand.u32 %s22, 1
        %s227 = scalar_lea.sflag [#allocation5], %s226
        %s228 = sand.u32 %s121, 1
        %s229 = smul.addr %s228, 128
        %s230 = scalar_lea.vmem [#allocation4], %s229
        %p231 = pneg %p162
        %p232 = pneg %p159
        %s233 = sand.u32 %s22, 1
        %s234 = scalar_lea.sflag [#allocation5], %s233
        %s235 = sand.u32 %s149, 1
        %s236 = smul.addr %s235, 128
        %s237 = scalar_lea.vmem [#allocation6], %s236
        %s238 = smul.u32 32, %s27
        %p239 = scmp.lt.s32.totalorder %s26, 1
        %s240 = scalar_select %p239, %s26, 1
        %p241 = scmp.lt.s32.totalorder %s238, 31
        %s242 = scalar_select %p241, %s238, 31
        %s243 = smul.addr %s240, 32
        %s244 = sadd.s32 %s242, %s243
        %s245 = smul.addr %s244, 4
        %s246 = scalar_lea.vmem %s0, %s245
        %s247 = smul.u32 32, %s27
        %s248 = smul.u32 32, %s27
        %s249 = smul.u32 32, %s27
        %s250 = smul.u32 32, %s27
        %v252 = vld [vmem:[%s246] sm:$0xf]
        %v253 = vld [vmem:[%s246 + $0x4] sm:$0xf]
        %v254 = vld [vmem:[%s246 + $0x8] sm:$0xf]
        %v255 = vld [vmem:[%s246 + $0xc] sm:$0xf]
        %v256 = vld [vmem:[%s246 + $0x10] sm:$0xf]
        %v257 = vld [vmem:[%s246 + $0x14] sm:$0xf]
        %v258 = vld [vmem:[%s246 + $0x18] sm:$0xf]
        %v259 = vld [vmem:[%s246 + $0x1c] sm:$0xf]
        %v260 = vld [vmem:[%s246 + $0x20] sm:$0xf]
        %v261 = vld [vmem:[%s246 + $0x24] sm:$0xf]
        %v262 = vld [vmem:[%s246 + $0x28] sm:$0xf]
        %v263 = vld [vmem:[%s246 + $0x2c] sm:$0xf]
        %v264 = vld [vmem:[%s246 + $0x30] sm:$0xf]
        %v265 = vld [vmem:[%s246 + $0x34] sm:$0xf]
        %v266 = vld [vmem:[%s246 + $0x38] sm:$0xf]
        %v267 = vld [vmem:[%s246 + $0x3c] sm:$0xf]
        %v268 = vld [vmem:[%s246 + $0x40] sm:$0xf]
        %v269 = vld [vmem:[%s246 + $0x44] sm:$0xf]
        %v270 = vld [vmem:[%s246 + $0x48] sm:$0xf]
        %v271 = vld [vmem:[%s246 + $0x4c] sm:$0xf]
        %v272 = vld [vmem:[%s246 + $0x50] sm:$0xf]
        %v273 = vld [vmem:[%s246 + $0x54] sm:$0xf]
        %v274 = vld [vmem:[%s246 + $0x58] sm:$0xf]
        %v275 = vld [vmem:[%s246 + $0x5c] sm:$0xf]
        %v276 = vld [vmem:[%s246 + $0x60] sm:$0xf]
        %v277 = vld [vmem:[%s246 + $0x64] sm:$0xf]
        %v278 = vld [vmem:[%s246 + $0x68] sm:$0xf]
        %v279 = vld [vmem:[%s246 + $0x6c] sm:$0xf]
        %v280 = vld [vmem:[%s246 + $0x70] sm:$0xf]
        %v281 = vld [vmem:[%s246 + $0x74] sm:$0xf]
        %v282 = vld [vmem:[%s246 + $0x78] sm:$0xf]
        %v283 = vld [vmem:[%s246 + $0x7c] sm:$0xf]
        %v284 = vld [vmem:[%s1] sm:$0x3f]
        %v317 = vunpack.c.l.b16 %v252
        %v318 = vunpack.c.l.b16 %v253
        %v319 = vunpack.c.l.b16 %v254
        %v320 = vunpack.c.l.b16 %v255
        %v321 = vunpack.c.l.b16 %v256
        %v322 = vunpack.c.l.b16 %v257
        %v323 = vunpack.c.l.b16 %v258
        %v324 = vunpack.c.l.b16 %v259
        %v325 = vunpack.c.l.b16 %v260
        %v326 = vunpack.c.l.b16 %v261
        %v327 = vunpack.c.l.b16 %v262
        %v328 = vunpack.c.l.b16 %v263
        %v329 = vunpack.c.l.b16 %v264
        %v330 = vunpack.c.l.b16 %v265
        %v331 = vunpack.c.l.b16 %v266
        %v332 = vunpack.c.l.b16 %v267
        %v333 = vunpack.c.l.b16 %v268
        %v334 = vunpack.c.l.b16 %v269
        %v335 = vunpack.c.l.b16 %v270
        %v336 = vunpack.c.l.b16 %v271
        %v337 = vunpack.c.l.b16 %v272
        %v338 = vunpack.c.l.b16 %v273
        %v339 = vunpack.c.l.b16 %v274
        %v340 = vunpack.c.l.b16 %v275
        %v341 = vunpack.c.l.b16 %v276
        %v342 = vunpack.c.l.b16 %v277
        %v343 = vunpack.c.l.b16 %v278
        %v344 = vunpack.c.l.b16 %v279
        %v345 = vunpack.c.l.b16 %v280
        %v346 = vunpack.c.l.b16 %v281
        %v347 = vunpack.c.l.b16 %v282
        %v348 = vunpack.c.l.b16 %v283
        %v349 = vpack.c.b16 %v318, %v317
        %v350 = vpack.c.b16 %v320, %v319
        %v351 = vpack.c.b16 %v322, %v321
        %v352 = vpack.c.b16 %v324, %v323
        %v353 = vpack.c.b16 %v326, %v325
        %v354 = vpack.c.b16 %v328, %v327
        %v355 = vpack.c.b16 %v330, %v329
        %v356 = vpack.c.b16 %v332, %v331
        %v357 = vpack.c.b16 %v334, %v333
        %v358 = vpack.c.b16 %v336, %v335
        %v359 = vpack.c.b16 %v338, %v337
        %v360 = vpack.c.b16 %v340, %v339
        %v361 = vpack.c.b16 %v342, %v341
        %v362 = vpack.c.b16 %v344, %v343
        %v363 = vpack.c.b16 %v346, %v345
        %v364 = vpack.c.b16 %v348, %v347
        %v366 = vcombine.high %v284, %v284
        %v368 = vunpack.c.l.s4 1983009808
        %v369 = vunpack.c.0.s8 %v368
        %v370 = vlaneseq
        %v371 = vshrl.u32 %v370, 7
        %v372 = vsub.s32 %v369, %v371
        %v373 = vrot.slane %v284, %v372
        %v375 = vunpack.c.l.s4 1983009808
        %v376 = vunpack.c.0.s8 %v375
        %v377 = vlaneseq
        %v378 = vshrl.u32 %v377, 7
        %v379 = vsub.s32 %v376, %v378
        %v380 = vrot.slane %v366, %v379
        %v381 = vcombine.high %v373, %v373
        %vm382 = vcmask 31744
        %v384 = vsel %vm382, %v349, 0
        %v387 = vsel %vm382, %v350, 0
        %v390 = vsel %vm382, %v351, 0
        %v393 = vsel %vm382, %v352, 0
        %v396 = vsel %vm382, %v353, 0
        %v399 = vsel %vm382, %v354, 0
        %v402 = vsel %vm382, %v355, 0
        %v405 = vsel %vm382, %v356, 0
        %v408 = vsel %vm382, %v357, 0
        %v411 = vsel %vm382, %v358, 0
        %v414 = vsel %vm382, %v359, 0
        %v417 = vsel %vm382, %v360, 0
        %v420 = vsel %vm382, %v361, 0
        %v423 = vsel %vm382, %v362, 0
        %v426 = vsel %vm382, %v363, 0
        %v429 = vsel %vm382, %v364, 0
        %vm431 = vcmask 1041408
        %v433 = vsel %vm431, %v373, 0
        %v436 = vsel %vm431, %v381, 0
        %v439 = vsel %vm431, %v380, 0
        %441 = vmatprep.subr.bf16.mxu0 %v436
        %442 = vmatpush1.bf16.msra.mxu0 %v433
        %443 = vmatprep.subr.bf16.mxu0 0
        %444 = vmatpush1.bf16.msra.mxu0 0
        %445 = vmatprep.subr.bf16.mxu0 0
        %446 = vmatpush1.bf16.msra.mxu0 0
        %447 = vmatprep.subr.bf16.mxu0 0
        %448 = vmatpush1.bf16.msra.mxu0 0
        %449 = vmatprep.subr.bf16.mxu0 0
        %450 = vmatpush1.bf16.msra.mxu0 0
        %451 = vmatprep.subr.bf16.mxu0 0
        %452 = vmatpush1.bf16.msra.mxu0 0
        %453 = vmatprep.subr.bf16.mxu0 0
        %454 = vmatpush1.bf16.msra.mxu0 0
        %455 = vmatprep.subr.bf16.mxu0 0
        %456 = vmatpush1.bf16.msra.mxu0 0
        %457 = vmatprep.subr.bf16.mxu0 0
        %458 = vmatpush1.bf16.msra.mxu0 0
        %459 = vmatprep.subr.bf16.mxu0 0
        %460 = vmatpush1.bf16.msra.mxu0 0
        %461 = vmatprep.subr.bf16.mxu0 0
        %462 = vmatpush1.bf16.msra.mxu0 0
        %463 = vmatprep.subr.bf16.mxu0 0
        %464 = vmatpush1.bf16.msra.mxu0 0
        %465 = vmatprep.subr.bf16.mxu0 0
        %466 = vmatpush1.bf16.msra.mxu0 0
        %467 = vmatprep.subr.bf16.mxu0 0
        %468 = vmatpush1.bf16.msra.mxu0 0
        %469 = vmatprep.subr.bf16.mxu0 0
        %470 = vmatpush1.bf16.msra.mxu0 0
        %471 = vmatprep.subr.bf16.mxu0 0
        %472 = vmatpush1.bf16.msra.mxu0 0
        %473 = vmatprep.mubr.bf16.mxu0 0
        %474 = vmatmul.mubr.bf16.gmra.mrb[0].mxu0 %v384
        %v475 = vpop.f32.mrb[0].mxu0
        %v476 = vadd.f32 0.0, %v475
        %v477 = vpop.f32.mrb[0].mxu0
        %v478 = vadd.f32 0.0, %v477
        %v479 = vpop.f32.mrb[0].mxu0
        %v480 = vadd.f32 0.0, %v479
        %v481 = vpop.f32.mrb[0].mxu0
        %v482 = vadd.f32 0.0, %v481
        %483 = vmatprep.mubr.bf16.mxu0 0
        %484 = vmatmul.mubr.bf16.gmra.mrb[0].mxu0 %v387
        %v485 = vpop.f32.mrb[0].mxu0
        %v486 = vadd.f32 0.0, %v485
        %v487 = vpop.f32.mrb[0].mxu0
        %v488 = vadd.f32 0.0, %v487
        %v489 = vpop.f32.mrb[0].mxu0
        %v490 = vadd.f32 0.0, %v489
        %v491 = vpop.f32.mrb[0].mxu0
        %v492 = vadd.f32 0.0, %v491
        %493 = vmatprep.mubr.bf16.mxu0 0
        %494 = vmatmul.mubr.bf16.gmra.mrb[0].mxu0 %v390
        %v495 = vpop.f32.mrb[0].mxu0
        %v496 = vadd.f32 0.0, %v495
        %v497 = vpop.f32.mrb[0].mxu0
        %v498 = vadd.f32 0.0, %v497
        %v499 = vpop.f32.mrb[0].mxu0
        %v500 = vadd.f32 0.0, %v499
        %v501 = vpop.f32.mrb[0].mxu0
        %v502 = vadd.f32 0.0, %v501
        %503 = vmatprep.mubr.bf16.mxu0 0
        %504 = vmatmul.mubr.bf16.gmra.mrb[0].mxu0 %v393
        %v505 = vpop.f32.mrb[0].mxu0
        %v506 = vadd.f32 0.0, %v505
        %v507 = vpop.f32.mrb[0].mxu0
        %v508 = vadd.f32 0.0, %v507
        %v509 = vpop.f32.mrb[0].mxu0
        %v510 = vadd.f32 0.0, %v509
        %v511 = vpop.f32.mrb[0].mxu0
        %v512 = vadd.f32 0.0, %v511
        %513 = vmatprep.mubr.bf16.mxu0 0
        %514 = vmatmul.mubr.bf16.gmra.mrb[0].mxu0 %v396
        %v515 = vpop.f32.mrb[0].mxu0
        %v516 = vadd.f32 0.0, %v515
        %v517 = vpop.f32.mrb[0].mxu0
        %v518 = vadd.f32 0.0, %v517
        %v519 = vpop.f32.mrb[0].mxu0
        %v520 = vadd.f32 0.0, %v519
        %v521 = vpop.f32.mrb[0].mxu0
        %v522 = vadd.f32 0.0, %v521
        %523 = vmatprep.mubr.bf16.mxu0 0
        %524 = vmatmul.mubr.bf16.gmra.mrb[0].mxu0 %v399
        %v525 = vpop.f32.mrb[0].mxu0
        %v526 = vadd.f32 0.0, %v525
        %v527 = vpop.f32.mrb[0].mxu0
        %v528 = vadd.f32 0.0, %v527
        %v529 = vpop.f32.mrb[0].mxu0
        %v530 = vadd.f32 0.0, %v529
        %v531 = vpop.f32.mrb[0].mxu0
        %v532 = vadd.f32 0.0, %v531
        %533 = vmatprep.mubr.bf16.mxu0 0
        %534 = vmatmul.mubr.bf16.gmra.mrb[0].mxu0 %v402
        %v535 = vpop.f32.mrb[0].mxu0
        %v536 = vadd.f32 0.0, %v535
        %v537 = vpop.f32.mrb[0].mxu0
        %v538 = vadd.f32 0.0, %v537
        %v539 = vpop.f32.mrb[0].mxu0
        %v540 = vadd.f32 0.0, %v539
        %v541 = vpop.f32.mrb[0].mxu0
        %v542 = vadd.f32 0.0, %v541
        %543 = vmatprep.mubr.bf16.mxu0 0
        %544 = vmatmul.mubr.bf16.gmra.mrb[0].mxu0 %v405
        %v545 = vpop.f32.mrb[0].mxu0
        %v546 = vadd.f32 0.0, %v545
        %v547 = vpop.f32.mrb[0].mxu0
        %v548 = vadd.f32 0.0, %v547
        %v549 = vpop.f32.mrb[0].mxu0
        %v550 = vadd.f32 0.0, %v549
        %v551 = vpop.f32.mrb[0].mxu0
        %v552 = vadd.f32 0.0, %v551
        %553 = vmatprep.mubr.bf16.mxu0 0
        %554 = vmatmul.mubr.bf16.gmra.mrb[0].mxu0 %v408
        %v555 = vpop.f32.mrb[0].mxu0
        %v556 = vadd.f32 0.0, %v555
        %v557 = vpop.f32.mrb[0].mxu0
        %v558 = vadd.f32 0.0, %v557
        %v559 = vpop.f32.mrb[0].mxu0
        %v560 = vadd.f32 0.0, %v559
        %v561 = vpop.f32.mrb[0].mxu0
        %v562 = vadd.f32 0.0, %v561
        %563 = vmatprep.mubr.bf16.mxu0 0
        %564 = vmatmul.mubr.bf16.gmra.mrb[0].mxu0 %v411
        %v565 = vpop.f32.mrb[0].mxu0
        %v566 = vadd.f32 0.0, %v565
        %v567 = vpop.f32.mrb[0].mxu0
        %v568 = vadd.f32 0.0, %v567
        %v569 = vpop.f32.mrb[0].mxu0
        %v570 = vadd.f32 0.0, %v569
        %v571 = vpop.f32.mrb[0].mxu0
        %v572 = vadd.f32 0.0, %v571
        %573 = vmatprep.mubr.bf16.mxu0 0
        %574 = vmatmul.mubr.bf16.gmra.mrb[0].mxu0 %v414
        %v575 = vpop.f32.mrb[0].mxu0
        %v576 = vadd.f32 0.0, %v575
        %v577 = vpop.f32.mrb[0].mxu0
        %v578 = vadd.f32 0.0, %v577
        %v579 = vpop.f32.mrb[0].mxu0
        %v580 = vadd.f32 0.0, %v579
        %v581 = vpop.f32.mrb[0].mxu0
        %v582 = vadd.f32 0.0, %v581
        %583 = vmatprep.mubr.bf16.mxu0 0
        %584 = vmatmul.mubr.bf16.gmra.mrb[0].mxu0 %v417
        %v585 = vpop.f32.mrb[0].mxu0
        %v586 = vadd.f32 0.0, %v585
        %v587 = vpop.f32.mrb[0].mxu0
        %v588 = vadd.f32 0.0, %v587
        %v589 = vpop.f32.mrb[0].mxu0
        %v590 = vadd.f32 0.0, %v589
        %v591 = vpop.f32.mrb[0].mxu0
        %v592 = vadd.f32 0.0, %v591
        %593 = vmatprep.mubr.bf16.mxu0 0
        %594 = vmatmul.mubr.bf16.gmra.mrb[0].mxu0 %v420
        %v595 = vpop.f32.mrb[0].mxu0
        %v596 = vadd.f32 0.0, %v595
        %v597 = vpop.f32.mrb[0].mxu0
        %v598 = vadd.f32 0.0, %v597
        %v599 = vpop.f32.mrb[0].mxu0
        %v600 = vadd.f32 0.0, %v599
        %v601 = vpop.f32.mrb[0].mxu0
        %v602 = vadd.f32 0.0, %v601
        %603 = vmatprep.mubr.bf16.mxu0 0
        %604 = vmatmul.mubr.bf16.gmra.mrb[0].mxu0 %v423
        %v605 = vpop.f32.mrb[0].mxu0
        %v606 = vadd.f32 0.0, %v605
        %v607 = vpop.f32.mrb[0].mxu0
        %v608 = vadd.f32 0.0, %v607
        %v609 = vpop.f32.mrb[0].mxu0
        %v610 = vadd.f32 0.0, %v609
        %v611 = vpop.f32.mrb[0].mxu0
        %v612 = vadd.f32 0.0, %v611
        %613 = vmatprep.mubr.bf16.mxu0 0
        %614 = vmatmul.mubr.bf16.gmra.mrb[0].mxu0 %v426
        %v615 = vpop.f32.mrb[0].mxu0
        %v616 = vadd.f32 0.0, %v615
        %v617 = vpop.f32.mrb[0].mxu0
        %v618 = vadd.f32 0.0, %v617
        %v619 = vpop.f32.mrb[0].mxu0
        %v620 = vadd.f32 0.0, %v619
        %v621 = vpop.f32.mrb[0].mxu0
        %v622 = vadd.f32 0.0, %v621
        %623 = vmatprep.mubr.bf16.mxu0 0
        %624 = vmatmul.mubr.bf16.gmra.mrb[0].mxu0 %v429
        %v625 = vpop.f32.mrb[0].mxu0
        %v626 = vadd.f32 0.0, %v625
        %v627 = vpop.f32.mrb[0].mxu0
        %v628 = vadd.f32 0.0, %v627
        %v629 = vpop.f32.mrb[0].mxu0
        %v630 = vadd.f32 0.0, %v629
        %v631 = vpop.f32.mrb[0].mxu0
        %v632 = vadd.f32 0.0, %v631
        %633 = vdwg.mxu0
        %634 = vmatprep.subr.bf16.mxu0 0
        %635 = vmatpush1.bf16.msra.mxu0 %v439
        %636 = vmatprep.subr.bf16.mxu0 0
        %637 = vmatpush1.bf16.msra.mxu0 0
        %638 = vmatprep.subr.bf16.mxu0 0
        %639 = vmatpush1.bf16.msra.mxu0 0
        %640 = vmatprep.subr.bf16.mxu0 0
        %641 = vmatpush1.bf16.msra.mxu0 0
        %642 = vmatprep.subr.bf16.mxu0 0
        %643 = vmatpush1.bf16.msra.mxu0 0
        %644 = vmatprep.subr.bf16.mxu0 0
        %645 = vmatpush1.bf16.msra.mxu0 0
        %646 = vmatprep.subr.bf16.mxu0 0
        %647 = vmatpush1.bf16.msra.mxu0 0
        %648 = vmatprep.subr.bf16.mxu0 0
        %649 = vmatpush1.bf16.msra.mxu0 0
        %650 = vmatprep.subr.bf16.mxu0 0
        %651 = vmatpush1.bf16.msra.mxu0 0
        %652 = vmatprep.subr.bf16.mxu0 0
        %653 = vmatpush1.bf16.msra.mxu0 0
        %654 = vmatprep.subr.bf16.mxu0 0
        %655 = vmatpush1.bf16.msra.mxu0 0
        %656 = vmatprep.subr.bf16.mxu0 0
        %657 = vmatpush1.bf16.msra.mxu0 0
        %658 = vmatprep.subr.bf16.mxu0 0
        %659 = vmatpush1.bf16.msra.mxu0 0
        %660 = vmatprep.subr.bf16.mxu0 0
        %661 = vmatpush1.bf16.msra.mxu0 0
        %662 = vmatprep.subr.bf16.mxu0 0
        %663 = vmatpush1.bf16.msra.mxu0 0
        %664 = vmatprep.subr.bf16.mxu0 0
        %665 = vmatpush1.bf16.msra.mxu0 0
        %666 = vmatprep.mubr.bf16.mxu0 0
        %667 = vmatmul.mubr.bf16.gmra.mrb[0].mxu0 %v384
        %v668 = vpop.f32.mrb[0].mxu0
        %v669 = vadd.f32 0.0, %v668
        %v670 = vpop.f32.mrb[0].mxu0
        %v671 = vpop.f32.mrb[0].mxu0
        %v672 = vadd.f32 0.0, %v671
        %v673 = vpop.f32.mrb[0].mxu0
        %674 = vmatprep.mubr.bf16.mxu0 0
        %675 = vmatmul.mubr.bf16.gmra.mrb[0].mxu0 %v387
        %v676 = vpop.f32.mrb[0].mxu0
        %v677 = vadd.f32 0.0, %v676
        %v678 = vpop.f32.mrb[0].mxu0
        %v679 = vpop.f32.mrb[0].mxu0
        %v680 = vadd.f32 0.0, %v679
        %v681 = vpop.f32.mrb[0].mxu0
        %682 = vmatprep.mubr.bf16.mxu0 0
        %683 = vmatmul.mubr.bf16.gmra.mrb[0].mxu0 %v390
        %v684 = vpop.f32.mrb[0].mxu0
        %v685 = vadd.f32 0.0, %v684
        %v686 = vpop.f32.mrb[0].mxu0
        %v687 = vpop.f32.mrb[0].mxu0
        %v688 = vadd.f32 0.0, %v687
        %v689 = vpop.f32.mrb[0].mxu0
        %690 = vmatprep.mubr.bf16.mxu0 0
        %691 = vmatmul.mubr.bf16.gmra.mrb[0].mxu0 %v393
        %v692 = vpop.f32.mrb[0].mxu0
        %v693 = vadd.f32 0.0, %v692
        %v694 = vpop.f32.mrb[0].mxu0
        %v695 = vpop.f32.mrb[0].mxu0
        %v696 = vadd.f32 0.0, %v695
        %v697 = vpop.f32.mrb[0].mxu0
        %698 = vmatprep.mubr.bf16.mxu0 0
        %699 = vmatmul.mubr.bf16.gmra.mrb[0].mxu0 %v396
        %v700 = vpop.f32.mrb[0].mxu0
        %v701 = vadd.f32 0.0, %v700
        %v702 = vpop.f32.mrb[0].mxu0
        %v703 = vpop.f32.mrb[0].mxu0
        %v704 = vadd.f32 0.0, %v703
        %v705 = vpop.f32.mrb[0].mxu0
        %706 = vmatprep.mubr.bf16.mxu0 0
        %707 = vmatmul.mubr.bf16.gmra.mrb[0].mxu0 %v399
        %v708 = vpop.f32.mrb[0].mxu0
        %v709 = vadd.f32 0.0, %v708
        %v710 = vpop.f32.mrb[0].mxu0
        %v711 = vpop.f32.mrb[0].mxu0
        %v712 = vadd.f32 0.0, %v711
        %v713 = vpop.f32.mrb[0].mxu0
        %714 = vmatprep.mubr.bf16.mxu0 0
        %715 = vmatmul.mubr.bf16.gmra.mrb[0].mxu0 %v402
        %v716 = vpop.f32.mrb[0].mxu0
        %v717 = vadd.f32 0.0, %v716
        %v718 = vpop.f32.mrb[0].mxu0
        %v719 = vpop.f32.mrb[0].mxu0
        %v720 = vadd.f32 0.0, %v719
        %v721 = vpop.f32.mrb[0].mxu0
        %722 = vmatprep.mubr.bf16.mxu0 0
        %723 = vmatmul.mubr.bf16.gmra.mrb[0].mxu0 %v405
        %v724 = vpop.f32.mrb[0].mxu0
        %v725 = vadd.f32 0.0, %v724
        %v726 = vpop.f32.mrb[0].mxu0
        %v727 = vpop.f32.mrb[0].mxu0
        %v728 = vadd.f32 0.0, %v727
        %v729 = vpop.f32.mrb[0].mxu0
        %730 = vmatprep.mubr.bf16.mxu0 0
        %731 = vmatmul.mubr.bf16.gmra.mrb[0].mxu0 %v408
        %v732 = vpop.f32.mrb[0].mxu0
        %v733 = vadd.f32 0.0, %v732
        %v734 = vpop.f32.mrb[0].mxu0
        %v735 = vpop.f32.mrb[0].mxu0
        %v736 = vadd.f32 0.0, %v735
        %v737 = vpop.f32.mrb[0].mxu0
        %738 = vmatprep.mubr.bf16.mxu0 0
        %739 = vmatmul.mubr.bf16.gmra.mrb[0].mxu0 %v411
        %v740 = vpop.f32.mrb[0].mxu0
        %v741 = vadd.f32 0.0, %v740
        %v742 = vpop.f32.mrb[0].mxu0
        %v743 = vpop.f32.mrb[0].mxu0
        %v744 = vadd.f32 0.0, %v743
        %v745 = vpop.f32.mrb[0].mxu0
        %746 = vmatprep.mubr.bf16.mxu0 0
        %747 = vmatmul.mubr.bf16.gmra.mrb[0].mxu0 %v414
        %v748 = vpop.f32.mrb[0].mxu0
        %v749 = vadd.f32 0.0, %v748
        %v750 = vpop.f32.mrb[0].mxu0
        %v751 = vpop.f32.mrb[0].mxu0
        %v752 = vadd.f32 0.0, %v751
        %v753 = vpop.f32.mrb[0].mxu0
        %754 = vmatprep.mubr.bf16.mxu0 0
        %755 = vmatmul.mubr.bf16.gmra.mrb[0].mxu0 %v417
        %v756 = vpop.f32.mrb[0].mxu0
        %v757 = vadd.f32 0.0, %v756
        %v758 = vpop.f32.mrb[0].mxu0
        %v759 = vpop.f32.mrb[0].mxu0
        %v760 = vadd.f32 0.0, %v759
        %v761 = vpop.f32.mrb[0].mxu0
        %762 = vmatprep.mubr.bf16.mxu0 0
        %763 = vmatmul.mubr.bf16.gmra.mrb[0].mxu0 %v420
        %v764 = vpop.f32.mrb[0].mxu0
        %v765 = vadd.f32 0.0, %v764
        %v766 = vpop.f32.mrb[0].mxu0
        %v767 = vpop.f32.mrb[0].mxu0
        %v768 = vadd.f32 0.0, %v767
        %v769 = vpop.f32.mrb[0].mxu0
        %770 = vmatprep.mubr.bf16.mxu0 0
        %771 = vmatmul.mubr.bf16.gmra.mrb[0].mxu0 %v423
        %v772 = vpop.f32.mrb[0].mxu0
        %v773 = vadd.f32 0.0, %v772
        %v774 = vpop.f32.mrb[0].mxu0
        %v775 = vpop.f32.mrb[0].mxu0
        %v776 = vadd.f32 0.0, %v775
        %v777 = vpop.f32.mrb[0].mxu0
        %778 = vmatprep.mubr.bf16.mxu0 0
        %779 = vmatmul.mubr.bf16.gmra.mrb[0].mxu0 %v426
        %v780 = vpop.f32.mrb[0].mxu0
        %v781 = vadd.f32 0.0, %v780
        %v782 = vpop.f32.mrb[0].mxu0
        %v783 = vpop.f32.mrb[0].mxu0
        %v784 = vadd.f32 0.0, %v783
        %v785 = vpop.f32.mrb[0].mxu0
        %786 = vmatprep.mubr.bf16.mxu0 0
        %787 = vmatmul.mubr.bf16.gmra.mrb[0].mxu0 %v429
        %v788 = vpop.f32.mrb[0].mxu0
        %v789 = vadd.f32 0.0, %v788
        %v790 = vpop.f32.mrb[0].mxu0
        %v791 = vpop.f32.mrb[0].mxu0
        %v792 = vadd.f32 0.0, %v791
        %v793 = vpop.f32.mrb[0].mxu0
        %794 = vdwg.mxu0
        %v795 = vpack.c.bf16 %v480, %v476
        %v796 = vpack.c.bf16 %v482, %v478
        %v797 = vpack.c.bf16 %v672, %v669
        %v798 = vpack.c.bf16 %v490, %v486
        %v799 = vpack.c.bf16 %v492, %v488
        %v800 = vpack.c.bf16 %v680, %v677
        %v801 = vpack.c.bf16 %v500, %v496
        %v802 = vpack.c.bf16 %v502, %v498
        %v803 = vpack.c.bf16 %v688, %v685
        %v804 = vpack.c.bf16 %v510, %v506
        %v805 = vpack.c.bf16 %v512, %v508
        %v806 = vpack.c.bf16 %v696, %v693
        %v807 = vpack.c.bf16 %v520, %v516
        %v808 = vpack.c.bf16 %v522, %v518
        %v809 = vpack.c.bf16 %v704, %v701
        %v810 = vpack.c.bf16 %v530, %v526
        %v811 = vpack.c.bf16 %v532, %v528
        %v812 = vpack.c.bf16 %v712, %v709
        %v813 = vpack.c.bf16 %v540, %v536
        %v814 = vpack.c.bf16 %v542, %v538
        %v815 = vpack.c.bf16 %v720, %v717
        %v816 = vpack.c.bf16 %v550, %v546
        %v817 = vpack.c.bf16 %v552, %v548
        %v818 = vpack.c.bf16 %v728, %v725
        %v819 = vpack.c.bf16 %v560, %v556
        %v820 = vpack.c.bf16 %v562, %v558
        %v821 = vpack.c.bf16 %v736, %v733
        %v822 = vpack.c.bf16 %v570, %v566
        %v823 = vpack.c.bf16 %v572, %v568
        %v824 = vpack.c.bf16 %v744, %v741
        %v825 = vpack.c.bf16 %v580, %v576
        %v826 = vpack.c.bf16 %v582, %v578
        %v827 = vpack.c.bf16 %v752, %v749
        %v828 = vpack.c.bf16 %v590, %v586
        %v829 = vpack.c.bf16 %v592, %v588
        %v830 = vpack.c.bf16 %v760, %v757
        %v831 = vpack.c.bf16 %v600, %v596
        %v832 = vpack.c.bf16 %v602, %v598
        %v833 = vpack.c.bf16 %v768, %v765
        %v834 = vpack.c.bf16 %v610, %v606
        %v835 = vpack.c.bf16 %v612, %v608
        %v836 = vpack.c.bf16 %v776, %v773
        %v837 = vpack.c.bf16 %v620, %v616
        %v838 = vpack.c.bf16 %v622, %v618
        %v839 = vpack.c.bf16 %v784, %v781
        %v840 = vpack.c.bf16 %v630, %v626
        %v841 = vpack.c.bf16 %v632, %v628
        %v842 = vpack.c.bf16 %v792, %v789
        %v859 = vunpack.c.l.b16 %v795
        %v860 = vunpack.c.h.b16 %v795
        %v861 = vunpack.c.l.b16 %v798
        %v862 = vunpack.c.h.b16 %v798
        %v863 = vunpack.c.l.b16 %v801
        %v864 = vunpack.c.h.b16 %v801
        %v865 = vunpack.c.l.b16 %v804
        %v866 = vunpack.c.h.b16 %v804
        %v867 = vunpack.c.l.b16 %v807
        %v868 = vunpack.c.h.b16 %v807
        %v869 = vunpack.c.l.b16 %v810
        %v870 = vunpack.c.h.b16 %v810
        %v871 = vunpack.c.l.b16 %v813
        %v872 = vunpack.c.h.b16 %v813
        %v873 = vunpack.c.l.b16 %v816
        %v874 = vunpack.c.h.b16 %v816
        %v875 = vunpack.c.l.b16 %v819
        %v876 = vunpack.c.h.b16 %v819
        %v877 = vunpack.c.l.b16 %v822
        %v878 = vunpack.c.h.b16 %v822
        %v879 = vunpack.c.l.b16 %v825
        %v880 = vunpack.c.h.b16 %v825
        %v881 = vunpack.c.l.b16 %v828
        %v882 = vunpack.c.h.b16 %v828
        %v883 = vunpack.c.l.b16 %v831
        %v884 = vunpack.c.h.b16 %v831
        %v885 = vunpack.c.l.b16 %v834
        %v886 = vunpack.c.h.b16 %v834
        %v887 = vunpack.c.l.b16 %v837
        %v888 = vunpack.c.h.b16 %v837
        %v889 = vunpack.c.l.b16 %v840
        %v890 = vunpack.c.h.b16 %v840
        %v891 = vpack.c.b16 %v859, %v859
        %v892 = vpack.c.b16 %v860, %v860
        %v893 = vpack.c.b16 %v861, %v861
        %v894 = vpack.c.b16 %v862, %v862
        %v895 = vpack.c.b16 %v863, %v863
        %v896 = vpack.c.b16 %v864, %v864
        %v897 = vpack.c.b16 %v865, %v865
        %v898 = vpack.c.b16 %v866, %v866
        %v899 = vpack.c.b16 %v867, %v867
        %v900 = vpack.c.b16 %v868, %v868
        %v901 = vpack.c.b16 %v869, %v869
        %v902 = vpack.c.b16 %v870, %v870
        %v903 = vpack.c.b16 %v871, %v871
        %v904 = vpack.c.b16 %v872, %v872
        %v905 = vpack.c.b16 %v873, %v873
        %v906 = vpack.c.b16 %v874, %v874
        %v907 = vpack.c.b16 %v875, %v875
        %v908 = vpack.c.b16 %v876, %v876
        %v909 = vpack.c.b16 %v877, %v877
        %v910 = vpack.c.b16 %v878, %v878
        %v911 = vpack.c.b16 %v879, %v879
        %v912 = vpack.c.b16 %v880, %v880
        %v913 = vpack.c.b16 %v881, %v881
        %v914 = vpack.c.b16 %v882, %v882
        %v915 = vpack.c.b16 %v883, %v883
        %v916 = vpack.c.b16 %v884, %v884
        %v917 = vpack.c.b16 %v885, %v885
        %v918 = vpack.c.b16 %v886, %v886
        %v919 = vpack.c.b16 %v887, %v887
        %v920 = vpack.c.b16 %v888, %v888
        %v921 = vpack.c.b16 %v889, %v889
        %v922 = vpack.c.b16 %v890, %v890
        %955 = vst [vmem:[%s223] sm:$0xf] %v891
        %956 = vst [vmem:[%s223 + $0x4] sm:$0xf] %v892
        %957 = vst [vmem:[%s223 + $0x8] sm:$0xf] %v893
        %958 = vst [vmem:[%s223 + $0xc] sm:$0xf] %v894
        %959 = vst [vmem:[%s223 + $0x10] sm:$0xf] %v895
        %960 = vst [vmem:[%s223 + $0x14] sm:$0xf] %v896
        %961 = vst [vmem:[%s223 + $0x18] sm:$0xf] %v897
        %962 = vst [vmem:[%s223 + $0x1c] sm:$0xf] %v898
        %963 = vst [vmem:[%s223 + $0x20] sm:$0xf] %v899
        %964 = vst [vmem:[%s223 + $0x24] sm:$0xf] %v900
        %965 = vst [vmem:[%s223 + $0x28] sm:$0xf] %v901
        %966 = vst [vmem:[%s223 + $0x2c] sm:$0xf] %v902
        %967 = vst [vmem:[%s223 + $0x30] sm:$0xf] %v903
        %968 = vst [vmem:[%s223 + $0x34] sm:$0xf] %v904
        %969 = vst [vmem:[%s223 + $0x38] sm:$0xf] %v905
        %970 = vst [vmem:[%s223 + $0x3c] sm:$0xf] %v906
        %971 = vst [vmem:[%s223 + $0x40] sm:$0xf] %v907
        %972 = vst [vmem:[%s223 + $0x44] sm:$0xf] %v908
        %973 = vst [vmem:[%s223 + $0x48] sm:$0xf] %v909
        %974 = vst [vmem:[%s223 + $0x4c] sm:$0xf] %v910
        %975 = vst [vmem:[%s223 + $0x50] sm:$0xf] %v911
        %976 = vst [vmem:[%s223 + $0x54] sm:$0xf] %v912
        %977 = vst [vmem:[%s223 + $0x58] sm:$0xf] %v913
        %978 = vst [vmem:[%s223 + $0x5c] sm:$0xf] %v914
        %979 = vst [vmem:[%s223 + $0x60] sm:$0xf] %v915
        %980 = vst [vmem:[%s223 + $0x64] sm:$0xf] %v916
        %981 = vst [vmem:[%s223 + $0x68] sm:$0xf] %v917
        %982 = vst [vmem:[%s223 + $0x6c] sm:$0xf] %v918
        %983 = vst [vmem:[%s223 + $0x70] sm:$0xf] %v919
        %984 = vst [vmem:[%s223 + $0x74] sm:$0xf] %v920
        %985 = vst [vmem:[%s223 + $0x78] sm:$0xf] %v921
        %986 = vst [vmem:[%s223 + $0x7c] sm:$0xf] %v922
        %v1003 = vunpack.c.l.b16 %v796
        %v1004 = vunpack.c.h.b16 %v796
        %v1005 = vunpack.c.l.b16 %v799
        %v1006 = vunpack.c.h.b16 %v799
        %v1007 = vunpack.c.l.b16 %v802
        %v1008 = vunpack.c.h.b16 %v802
        %v1009 = vunpack.c.l.b16 %v805
        %v1010 = vunpack.c.h.b16 %v805
        %v1011 = vunpack.c.l.b16 %v808
        %v1012 = vunpack.c.h.b16 %v808
        %v1013 = vunpack.c.l.b16 %v811
        %v1014 = vunpack.c.h.b16 %v811
        %v1015 = vunpack.c.l.b16 %v814
        %v1016 = vunpack.c.h.b16 %v814
        %v1017 = vunpack.c.l.b16 %v817
        %v1018 = vunpack.c.h.b16 %v817
        %v1019 = vunpack.c.l.b16 %v820
        %v1020 = vunpack.c.h.b16 %v820
        %v1021 = vunpack.c.l.b16 %v823
        %v1022 = vunpack.c.h.b16 %v823
        %v1023 = vunpack.c.l.b16 %v826
        %v1024 = vunpack.c.h.b16 %v826
        %v1025 = vunpack.c.l.b16 %v829
        %v1026 = vunpack.c.h.b16 %v829
        %v1027 = vunpack.c.l.b16 %v832
        %v1028 = vunpack.c.h.b16 %v832
        %v1029 = vunpack.c.l.b16 %v835
        %v1030 = vunpack.c.h.b16 %v835
        %v1031 = vunpack.c.l.b16 %v838
        %v1032 = vunpack.c.h.b16 %v838
        %v1033 = vunpack.c.l.b16 %v841
        %v1034 = vunpack.c.h.b16 %v841
        %v1035 = vpack.c.b16 %v1003, %v1003
        %v1036 = vpack.c.b16 %v1004, %v1004
        %v1037 = vpack.c.b16 %v1005, %v1005
        %v1038 = vpack.c.b16 %v1006, %v1006
        %v1039 = vpack.c.b16 %v1007, %v1007
        %v1040 = vpack.c.b16 %v1008, %v1008
        %v1041 = vpack.c.b16 %v1009, %v1009
        %v1042 = vpack.c.b16 %v1010, %v1010
        %v1043 = vpack.c.b16 %v1011, %v1011
        %v1044 = vpack.c.b16 %v1012, %v1012
        %v1045 = vpack.c.b16 %v1013, %v1013
        %v1046 = vpack.c.b16 %v1014, %v1014
        %v1047 = vpack.c.b16 %v1015, %v1015
        %v1048 = vpack.c.b16 %v1016, %v1016
        %v1049 = vpack.c.b16 %v1017, %v1017
        %v1050 = vpack.c.b16 %v1018, %v1018
        %v1051 = vpack.c.b16 %v1019, %v1019
        %v1052 = vpack.c.b16 %v1020, %v1020
        %v1053 = vpack.c.b16 %v1021, %v1021
        %v1054 = vpack.c.b16 %v1022, %v1022
        %v1055 = vpack.c.b16 %v1023, %v1023
        %v1056 = vpack.c.b16 %v1024, %v1024
        %v1057 = vpack.c.b16 %v1025, %v1025
        %v1058 = vpack.c.b16 %v1026, %v1026
        %v1059 = vpack.c.b16 %v1027, %v1027
        %v1060 = vpack.c.b16 %v1028, %v1028
        %v1061 = vpack.c.b16 %v1029, %v1029
        %v1062 = vpack.c.b16 %v1030, %v1030
        %v1063 = vpack.c.b16 %v1031, %v1031
        %v1064 = vpack.c.b16 %v1032, %v1032
        %v1065 = vpack.c.b16 %v1033, %v1033
        %v1066 = vpack.c.b16 %v1034, %v1034
        %1099 = vst [vmem:[%s230] sm:$0xf] %v1035
        %1100 = vst [vmem:[%s230 + $0x4] sm:$0xf] %v1036
        %1101 = vst [vmem:[%s230 + $0x8] sm:$0xf] %v1037
        %1102 = vst [vmem:[%s230 + $0xc] sm:$0xf] %v1038
        %1103 = vst [vmem:[%s230 + $0x10] sm:$0xf] %v1039
        %1104 = vst [vmem:[%s230 + $0x14] sm:$0xf] %v1040
        %1105 = vst [vmem:[%s230 + $0x18] sm:$0xf] %v1041
        %1106 = vst [vmem:[%s230 + $0x1c] sm:$0xf] %v1042
        %1107 = vst [vmem:[%s230 + $0x20] sm:$0xf] %v1043
        %1108 = vst [vmem:[%s230 + $0x24] sm:$0xf] %v1044
        %1109 = vst [vmem:[%s230 + $0x28] sm:$0xf] %v1045
        %1110 = vst [vmem:[%s230 + $0x2c] sm:$0xf] %v1046
        %1111 = vst [vmem:[%s230 + $0x30] sm:$0xf] %v1047
        %1112 = vst [vmem:[%s230 + $0x34] sm:$0xf] %v1048
        %1113 = vst [vmem:[%s230 + $0x38] sm:$0xf] %v1049
        %1114 = vst [vmem:[%s230 + $0x3c] sm:$0xf] %v1050
        %1115 = vst [vmem:[%s230 + $0x40] sm:$0xf] %v1051
        %1116 = vst [vmem:[%s230 + $0x44] sm:$0xf] %v1052
        %1117 = vst [vmem:[%s230 + $0x48] sm:$0xf] %v1053
        %1118 = vst [vmem:[%s230 + $0x4c] sm:$0xf] %v1054
        %1119 = vst [vmem:[%s230 + $0x50] sm:$0xf] %v1055
        %1120 = vst [vmem:[%s230 + $0x54] sm:$0xf] %v1056
        %1121 = vst [vmem:[%s230 + $0x58] sm:$0xf] %v1057
        %1122 = vst [vmem:[%s230 + $0x5c] sm:$0xf] %v1058
        %1123 = vst [vmem:[%s230 + $0x60] sm:$0xf] %v1059
        %1124 = vst [vmem:[%s230 + $0x64] sm:$0xf] %v1060
        %1125 = vst [vmem:[%s230 + $0x68] sm:$0xf] %v1061
        %1126 = vst [vmem:[%s230 + $0x6c] sm:$0xf] %v1062
        %1127 = vst [vmem:[%s230 + $0x70] sm:$0xf] %v1063
        %1128 = vst [vmem:[%s230 + $0x74] sm:$0xf] %v1064
        %1129 = vst [vmem:[%s230 + $0x78] sm:$0xf] %v1065
        %1130 = vst [vmem:[%s230 + $0x7c] sm:$0xf] %v1066
        %v1147 = vunpack.c.l.b16 %v797
        %v1148 = vunpack.c.h.b16 %v797
        %v1149 = vunpack.c.l.b16 %v800
        %v1150 = vunpack.c.h.b16 %v800
        %v1151 = vunpack.c.l.b16 %v803
        %v1152 = vunpack.c.h.b16 %v803
        %v1153 = vunpack.c.l.b16 %v806
        %v1154 = vunpack.c.h.b16 %v806
        %v1155 = vunpack.c.l.b16 %v809
        %v1156 = vunpack.c.h.b16 %v809
        %v1157 = vunpack.c.l.b16 %v812
        %v1158 = vunpack.c.h.b16 %v812
        %v1159 = vunpack.c.l.b16 %v815
        %v1160 = vunpack.c.h.b16 %v815
        %v1161 = vunpack.c.l.b16 %v818
        %v1162 = vunpack.c.h.b16 %v818
        %v1163 = vunpack.c.l.b16 %v821
        %v1164 = vunpack.c.h.b16 %v821
        %v1165 = vunpack.c.l.b16 %v824
        %v1166 = vunpack.c.h.b16 %v824
        %v1167 = vunpack.c.l.b16 %v827
        %v1168 = vunpack.c.h.b16 %v827
        %v1169 = vunpack.c.l.b16 %v830
        %v1170 = vunpack.c.h.b16 %v830
        %v1171 = vunpack.c.l.b16 %v833
        %v1172 = vunpack.c.h.b16 %v833
        %v1173 = vunpack.c.l.b16 %v836
        %v1174 = vunpack.c.h.b16 %v836
        %v1175 = vunpack.c.l.b16 %v839
        %v1176 = vunpack.c.h.b16 %v839
        %v1177 = vunpack.c.l.b16 %v842
        %v1178 = vunpack.c.h.b16 %v842
        %v1179 = vpack.c.b16 %v1147, %v1147
        %v1180 = vpack.c.b16 %v1148, %v1148
        %v1181 = vpack.c.b16 %v1149, %v1149
        %v1182 = vpack.c.b16 %v1150, %v1150
        %v1183 = vpack.c.b16 %v1151, %v1151
        %v1184 = vpack.c.b16 %v1152, %v1152
        %v1185 = vpack.c.b16 %v1153, %v1153
        %v1186 = vpack.c.b16 %v1154, %v1154
        %v1187 = vpack.c.b16 %v1155, %v1155
        %v1188 = vpack.c.b16 %v1156, %v1156
        %v1189 = vpack.c.b16 %v1157, %v1157
        %v1190 = vpack.c.b16 %v1158, %v1158
        %v1191 = vpack.c.b16 %v1159, %v1159
        %v1192 = vpack.c.b16 %v1160, %v1160
        %v1193 = vpack.c.b16 %v1161, %v1161
        %v1194 = vpack.c.b16 %v1162, %v1162
        %v1195 = vpack.c.b16 %v1163, %v1163
        %v1196 = vpack.c.b16 %v1164, %v1164
        %v1197 = vpack.c.b16 %v1165, %v1165
        %v1198 = vpack.c.b16 %v1166, %v1166
        %v1199 = vpack.c.b16 %v1167, %v1167
        %v1200 = vpack.c.b16 %v1168, %v1168
        %v1201 = vpack.c.b16 %v1169, %v1169
        %v1202 = vpack.c.b16 %v1170, %v1170
        %v1203 = vpack.c.b16 %v1171, %v1171
        %v1204 = vpack.c.b16 %v1172, %v1172
        %v1205 = vpack.c.b16 %v1173, %v1173
        %v1206 = vpack.c.b16 %v1174, %v1174
        %v1207 = vpack.c.b16 %v1175, %v1175
        %v1208 = vpack.c.b16 %v1176, %v1176
        %v1209 = vpack.c.b16 %v1177, %v1177
        %v1210 = vpack.c.b16 %v1178, %v1178
        %1243 = vst [vmem:[%s237] sm:$0xf] %v1179
        %1244 = vst [vmem:[%s237 + $0x4] sm:$0xf] %v1180
        %1245 = vst [vmem:[%s237 + $0x8] sm:$0xf] %v1181
        %1246 = vst [vmem:[%s237 + $0xc] sm:$0xf] %v1182
        %1247 = vst [vmem:[%s237 + $0x10] sm:$0xf] %v1183
        %1248 = vst [vmem:[%s237 + $0x14] sm:$0xf] %v1184
        %1249 = vst [vmem:[%s237 + $0x18] sm:$0xf] %v1185
        %1250 = vst [vmem:[%s237 + $0x1c] sm:$0xf] %v1186
        %1251 = vst [vmem:[%s237 + $0x20] sm:$0xf] %v1187
        %1252 = vst [vmem:[%s237 + $0x24] sm:$0xf] %v1188
        %1253 = vst [vmem:[%s237 + $0x28] sm:$0xf] %v1189
        %1254 = vst [vmem:[%s237 + $0x2c] sm:$0xf] %v1190
        %1255 = vst [vmem:[%s237 + $0x30] sm:$0xf] %v1191
        %1256 = vst [vmem:[%s237 + $0x34] sm:$0xf] %v1192
        %1257 = vst [vmem:[%s237 + $0x38] sm:$0xf] %v1193
        %1258 = vst [vmem:[%s237 + $0x3c] sm:$0xf] %v1194
        %1259 = vst [vmem:[%s237 + $0x40] sm:$0xf] %v1195
        %1260 = vst [vmem:[%s237 + $0x44] sm:$0xf] %v1196
        %1261 = vst [vmem:[%s237 + $0x48] sm:$0xf] %v1197
        %1262 = vst [vmem:[%s237 + $0x4c] sm:$0xf] %v1198
        %1263 = vst [vmem:[%s237 + $0x50] sm:$0xf] %v1199
        %1264 = vst [vmem:[%s237 + $0x54] sm:$0xf] %v1200
        %1265 = vst [vmem:[%s237 + $0x58] sm:$0xf] %v1201
        %1266 = vst [vmem:[%s237 + $0x5c] sm:$0xf] %v1202
        %1267 = vst [vmem:[%s237 + $0x60] sm:$0xf] %v1203
        %1268 = vst [vmem:[%s237 + $0x64] sm:$0xf] %v1204
        %1269 = vst [vmem:[%s237 + $0x68] sm:$0xf] %v1205
        %1270 = vst [vmem:[%s237 + $0x6c] sm:$0xf] %v1206
        %1271 = vst [vmem:[%s237 + $0x70] sm:$0xf] %v1207
        %1272 = vst [vmem:[%s237 + $0x74] sm:$0xf] %v1208
        %1273 = vst [vmem:[%s237 + $0x78] sm:$0xf] %v1209
        %1274 = vst [vmem:[%s237 + $0x7c] sm:$0xf] %v1210
        %s1275 = sand.u32 %s93, 1
        %s1276 = scalar_lea.sflag [#allocation3], %s1275
        %s1277 = sand.u32 %s93, 1
        %s1278 = smul.addr %s1277, 128
        %s1279 = scalar_lea.vmem [#allocation2], %s1278
        %s1280 = sand.u32 %s22, 1
        %s1281 = scalar_lea.sflag [#allocation5], %s1280
        %s1282 = sand.u32 %s121, 1
        %s1283 = smul.addr %s1282, 128
        %s1284 = scalar_lea.vmem [#allocation4], %s1283
        %s1285 = sand.u32 %s22, 1
        %s1286 = scalar_lea.sflag [#allocation5], %s1285
        %s1287 = sand.u32 %s149, 1
        %s1288 = smul.addr %s1287, 128
        %s1289 = scalar_lea.vmem [#allocation6], %s1288
        // Predicated region
        $region29: #{tpu_custom_call.1} parent=27 // pred_check
          %p1290 = pneg %p103
        $region30: #{tpu_custom_call.1} parent=27 // pred_check_branch
          %1292 = sbr.rel (%p1290) target = $region32
        $region31: #{tpu_custom_call.1} parent=27 // pred_region
          %s1293 = smul.u32 32, %s27
          %s1295 = ssub.s32 2048, 2048
          %1296 = vsyncadd %s1276, %s1295
          %s1297 = smul.addr %s26, 32
          %s1298 = sadd.s32 %s1293, %s1297
          %s1299 = smul.addr %s1298, 64
          %s1300 = scalar_lea.hbm %s2, %s1299
          %s1301 = sshll.u32 %s1279, 4
          %s1302 = int_to_ptr.vmem [resolvable:$true] %s1301
          %1307 = dma.vmem_to_hbm [thread:$0]  %s1302, 2048, %s1300, %s1276, 64, 64, 4
        $region32: #{tpu_custom_call.1} parent=27 // pred_fallthru
          _
        // Predicated region
        $region33: #{tpu_custom_call.1} parent=27 // pred_check
          %p1308 = pneg %p131
        $region34: #{tpu_custom_call.1} parent=27 // pred_check_branch
          %1310 = sbr.rel (%p1308) target = $region36
        $region35: #{tpu_custom_call.1} parent=27 // pred_region
          %s1311 = smul.u32 32, %s27
          %s1313 = ssub.s32 2048, 2048
          %1314 = vsyncadd %s1281, %s1313
          %s1315 = smul.addr %s26, 32
          %s1316 = sadd.s32 %s1311, %s1315
          %s1317 = smul.addr %s1316, 64
          %s1318 = scalar_lea.hbm %s3, %s1317
          %s1319 = sshll.u32 %s1284, 4
          %s1320 = int_to_ptr.vmem [resolvable:$true] %s1319
          %1325 = dma.vmem_to_hbm [thread:$0]  %s1320, 2048, %s1318, %s1281, 64, 64, 4
        $region36: #{tpu_custom_call.1} parent=27 // pred_fallthru
          _
        // Predicated region
        $region37: #{tpu_custom_call.1} parent=27 // pred_check
          %p1326 = pneg %p159
        $region38: #{tpu_custom_call.1} parent=27 // pred_check_branch
          %1328 = sbr.rel (%p1326) target = $region40
        $region39: #{tpu_custom_call.1} parent=27 // pred_region
          %s1329 = smul.u32 32, %s27
          %s1331 = ssub.s32 2048, 2048
          %1332 = vsyncadd %s1286, %s1331
          %s1333 = smul.addr %s26, 32
          %s1334 = sadd.s32 %s1329, %s1333
          %s1335 = smul.addr %s1334, 64
          %s1336 = scalar_lea.hbm %s4, %s1335
          %s1337 = sshll.u32 %s1289, 4
          %s1338 = int_to_ptr.vmem [resolvable:$true] %s1337
          %1343 = dma.vmem_to_hbm [thread:$0]  %s1338, 2048, %s1336, %s1286, 64, 64, 4
        $region40: #{tpu_custom_call.1} parent=27 // pred_fallthru
          _
      $region28: #{tpu_custom_call.1} parent=5 // pred_fallthru
        _
      %p1344 = scmp.le.s32.totalorder 2, %s17
      // Predicated region
      $region41: #{tpu_custom_call.1} parent=5 // pred_check
        %p1345 = pneg %p1344
      $region42: #{tpu_custom_call.1} parent=5 // pred_check_branch
        %1347 = sbr.rel (%p1345) target = $region44
      $region43: #{tpu_custom_call.1} parent=5 // pred_region
        %s1348 = ssub.s32 %s17, 2
        // Predicated region
        $region45: #{tpu_custom_call.1} parent=43 // pred_check
          %p1349 = pneg %p109
        $region46: #{tpu_custom_call.1} parent=43 // pred_check_branch
          %1351 = sbr.rel (%p1349) target = $region48
        $region47: #{tpu_custom_call.1} parent=43 // pred_region
          %s1352 = sand.u32 %s94, 1
          %s1353 = scalar_lea.sflag [#allocation3], %s1352
          %s1354 = sand.u32 %s94, 1
          %s1355 = smul.addr %s1354, 128
          %s1356 = scalar_lea.vmem [#allocation2], %s1355
          %1357 = dma.done %s1353, 2048
        $region48: #{tpu_custom_call.1} parent=43 // pred_fallthru
          _
        // Predicated region
        $region49: #{tpu_custom_call.1} parent=43 // pred_check
          %p1358 = pneg %p137
        $region50: #{tpu_custom_call.1} parent=43 // pred_check_branch
          %1360 = sbr.rel (%p1358) target = $region52
        $region51: #{tpu_custom_call.1} parent=43 // pred_region
          %s1361 = sand.u32 %s23, 1
          %s1362 = scalar_lea.sflag [#allocation5], %s1361
          %s1363 = sand.u32 %s122, 1
          %s1364 = smul.addr %s1363, 128
          %s1365 = scalar_lea.vmem [#allocation4], %s1364
          %1366 = dma.done %s1362, 2048
        $region52: #{tpu_custom_call.1} parent=43 // pred_fallthru
          _
        // Predicated region
        $region53: #{tpu_custom_call.1} parent=43 // pred_check
          %p1367 = pneg %p165
        $region54: #{tpu_custom_call.1} parent=43 // pred_check_branch
          %1369 = sbr.rel (%p1367) target = $region56
        $region55: #{tpu_custom_call.1} parent=43 // pred_region
          %s1370 = sand.u32 %s23, 1
          %s1371 = scalar_lea.sflag [#allocation5], %s1370
          %s1372 = sand.u32 %s150, 1
          %s1373 = smul.addr %s1372, 128
          %s1374 = scalar_lea.vmem [#allocation6], %s1373
          %1375 = dma.done %s1371, 2048
        $region56: #{tpu_custom_call.1} parent=43 // pred_fallthru
          _
      $region44: #{tpu_custom_call.1} parent=5 // pred_fallthru
        _
    $region6: #{tpu_custom_call.1} parent=1 // loop_footer
      %s21 = sadd.s32 1, %s17
    $region7: #{tpu_custom_call.1} parent=1 // loop_footer_branch
      %16 = sbr.rel target = $region3
    $region8: #{tpu_custom_call.1} parent=1 // loop_exit
      _
    %1376 = vsyncpa [#allocation3], 1
    %s1377 = scalar_lea.sflag [#allocation3], 1
    %1378 = vsyncpa %s1377, 1
    %1379 = vsyncpa [#allocation5], 1
    %s1380 = scalar_lea.sflag [#allocation5], 1
    %1381 = vsyncpa %s1380, 1

</llo_original>
